<compile_context>
chip_gen: v6e
topology: v6e:2x2x1
jax: 0.10.0
libtpu: 0.0.40
codegen_flags: <defaults>
</compile_context>

<pallas_src>
import functools

import jax
import jax.numpy as jnp
from jax.experimental import pallas as pl
from jax.experimental.pallas import tpu as pltpu

_LANES = 128
_MAX_ROW_TILE = 1024  # 1024 x 128 f32 = 512 KiB per input block


def _round_up(v, m):
    return ((v + m - 1) // m) * m


def _charbonnier_kernel(x_ref, y_ref, o_ref, *, eps2, tiles_per_slice,
                        last_tile, rem_elems, needs_mask, has_phantom):
    c = pl.program_id(0)  # parallel slice (shardable across TensorCores)
    i = pl.program_id(1)  # sequential reduction axis within the slice

    @pl.when(i == 0)
    def _():
        o_ref[...] = jnp.zeros_like(o_ref)

    d = x_ref[...].astype(jnp.float32) - y_ref[...].astype(jnp.float32)
    val = jnp.sqrt(d * d + jnp.float32(eps2))

    if not needs_mask and not has_phantom:
        # Every tile is completely filled with valid elements.
        o_ref[...] += val
        return

    tile_idx = c * tiles_per_slice + i

    if needs_mask:
        @pl.when(tile_idx < last_tile)
        def _():
            o_ref[...] += val

        @pl.when(tile_idx == last_tile)
        def _():
            # Mask the tail: lane padding + rows past the end of the data.
            rows, lanes = val.shape
            rid = jax.lax.broadcasted_iota(jnp.int32, (rows, lanes), 0)
            lid = jax.lax.broadcasted_iota(jnp.int32, (rows, lanes), 1)
            local_idx = rid * lanes + lid
            o_ref[...] += jnp.where(local_idx < rem_elems, val, 0.0)
        # tile_idx > last_tile (phantom tile from the odd split) is skipped.
    else:
        # No masking needed, but a phantom tile exists: skip it.
        @pl.when(tile_idx <= last_tile)
        def _():
            o_ref[...] += val


def charbonnier_loss(x, y, eps=1e-3, max_row_tile=_MAX_ROW_TILE):
    """Charbonnier loss: mean(sqrt((x - y)^2 + eps^2)) over all elements."""
    assert x.shape == y.shape, "x and y must have the same shape"
    n_elems = x.size

    # Flatten in the original dtype (free reshape); the cast to f32 happens
    # inside the kernel so bf16/fp16 inputs only stream half the HBM bytes.
    xf = x.reshape(-1)
    yf = y.reshape(-1)

    # Pad only the <128-element lane tail when needed (masked out in-kernel).
    lane_pad = (-n_elems) % _LANES
    if lane_pad:
        xf = jnp.pad(xf, (0, lane_pad))
        yf = jnp.pad(yf, (0, lane_pad))

    rows = (n_elems + lane_pad) // _LANES
    x2d = xf.reshape(rows, _LANES)
    y2d = yf.reshape(rows, _LANES)

    # Row tile: big (up to max_row_tile rows) but not wildly larger than the
    # data. Multiple of 32 keeps sublane alignment for f32/bf16/int8 alike.
    row_tile = min(max_row_tile, _round_up(rows, 32))
    n_tiles = pl.cdiv(rows, row_tile)

    # Shard across 2 TensorCores (v7x) whenever there is more than one tile.
    # Odd tile counts are handled by one clamped-and-skipped "phantom" tile.
    n_slices = 2 if n_tiles >= 2 else 1
    tiles_per_slice = pl.cdiv(n_tiles, n_slices)
    has_phantom = n_slices * tiles_per_slice > n_tiles

    tile_elems = row_tile * _LANES
    last_tile = n_tiles - 1
    rem_elems = n_elems - last_tile * tile_elems  # valid elements in last tile
    needs_mask = rem_elems < tile_elems

    kernel = functools.partial(
        _charbonnier_kernel,
        eps2=float(eps) * float(eps),
        tiles_per_slice=tiles_per_slice,
        last_tile=last_tile,
        rem_elems=rem_elems,
        needs_mask=needs_mask,
        has_phantom=has_phantom,
    )

    if has_phantom:
        # Clamp the phantom tile's block index so its DMA stays in bounds;
        # the kernel skips its accumulation.
        def in_map(c, i):
            return (jnp.minimum(c * tiles_per_slice + i, last_tile), 0)
    else:
        def in_map(c, i):
            return (c * tiles_per_slice + i, 0)

    partial_sums = pl.pallas_call(
        kernel,
        out_shape=jax.ShapeDtypeStruct((n_slices * row_tile, _LANES),
                                       jnp.float32),
        grid_spec=pltpu.PrefetchScalarGridSpec(
            num_scalar_prefetch=0,
            grid=(n_slices, tiles_per_slice),
            in_specs=[
                pl.BlockSpec((row_tile, _LANES), in_map),
                pl.BlockSpec((row_tile, _LANES), in_map),
            ],
            out_specs=pl.BlockSpec((row_tile, _LANES), lambda c, i: (c, 0)),
        ),
        compiler_params=pltpu.CompilerParams(
            dimension_semantics=("parallel", "arbitrary"),
        ),
    )(x2d, y2d)

    # Single tiny reduction + divide, fused into one wrapper op.
    return jnp.sum(partial_sums) / jnp.float32(n_elems)


def _ref_loss(x, y, eps=1e-3):
    d = x.astype(jnp.float32) - y.astype(jnp.float32)
    return jnp.mean(jnp.sqrt(d * d + jnp.float32(eps) * jnp.float32(eps)))


if __name__ == "__main__":
    key = jax.random.PRNGKey(0)
    kx, ky = jax.random.split(key)

    # NCHW, matching the PyTorch module's expected inputs.
    x = jax.random.normal(kx, (2, 4, 16, 16), dtype=jnp.float32)
    y = jax.random.normal(ky, (2, 4, 16, 16), dtype=jnp.float32)

    loss = jax.block_until_ready(charbonnier_loss(x, y, eps=1e-3))
    ref = _ref_loss(x, y, eps=1e-3)
    assert jnp.allclose(loss, ref, rtol=1e-5, atol=1e-6), (loss, ref)

    # Non-lane-aligned size exercises the in-kernel tail masking.
    k2x, k2y = jax.random.split(jax.random.PRNGKey(1))
    x2 = jax.random.normal(k2x, (3, 5, 7, 11), dtype=jnp.float32)
    y2 = jax.random.normal(k2y, (3, 5, 7, 11), dtype=jnp.float32)
    loss2 = jax.block_until_ready(charbonnier_loss(x2, y2, eps=1e-3))
    ref2 = _ref_loss(x2, y2, eps=1e-3)
    assert jnp.allclose(loss2, ref2, rtol=1e-5, atol=1e-6), (loss2, ref2)

    # Odd tile count (phantom tile + megacore split path), no masking:
    # 2*48*128 = 12288 elems, max_row_tile=32 -> 3 tiles across 2 slices.
    k3x, k3y = jax.random.split(jax.random.PRNGKey(2))
    x3 = jax.random.normal(k3x, (2, 48, 128), dtype=jnp.float32)
    y3 = jax.random.normal(k3y, (2, 48, 128), dtype=jnp.float32)
    loss3 = jax.block_until_ready(charbonnier_loss(x3, y3, eps=1e-3,
                                                   max_row_tile=32))
    ref3 = _ref_loss(x3, y3, eps=1e-3)
    assert jnp.allclose(loss3, ref3, rtol=1e-5, atol=1e-6), (loss3, ref3)

    # Odd tile count + masked last tile + bf16 inputs (in-kernel f32 cast).
    k4x, k4y = jax.random.split(jax.random.PRNGKey(3))
    x4 = jax.random.normal(k4x, (2, 29, 211), dtype=jnp.bfloat16)
    y4 = jax.random.normal(k4y, (2, 29, 211), dtype=jnp.bfloat16)
    loss4 = jax.block_until_ready(charbonnier_loss(x4, y4, eps=1e-3,
                                                   max_row_tile=32))
    ref4 = _ref_loss(x4, y4, eps=1e-3)
    assert jnp.allclose(loss4, ref4, rtol=1e-4, atol=1e-5), (loss4, ref4)

    print("KERNEL_OK")
</pallas_src>

<mosaic_0001>
module attributes {stable_mosaic.version = 11 : i64} {
  func.func @_charbonnier_kernel(%arg0: i32, %arg1: i32, %arg2: memref<32x128xf32, #tpu.memory_space<vmem>>, %arg3: memref<32x128xf32, #tpu.memory_space<vmem>>, %arg4: memref<32x128xf32, #tpu.memory_space<vmem>>) attributes {dimension_semantics = [#tpu.dimension_semantics<parallel>, #tpu.dimension_semantics<arbitrary>], iteration_bounds = array<i64: 1, 1>, scalar_prefetch = 0 : i64, scratch_operands = 0 : i64, tpu.core_type = #tpu.core_type<tc>, window_params = [{transform_indices = @transform_0, window_bounds = array<i64: 32, 128>}, {transform_indices = @transform_1, window_bounds = array<i64: 32, 128>}, {transform_indices = @transform_2, window_bounds = array<i64: 32, 128>}]} {
    %c0_i32 = arith.constant 0 : i32
    %0 = arith.cmpi eq, %arg1, %c0_i32 : i32
    %1 = arith.extui %0 : i1 to i32
    %c0_i32_0 = arith.constant 0 : i32
    %2 = arith.cmpi ne, %1, %c0_i32_0 : i32
    scf.if %2 {
      %cst_8 = arith.constant 0.000000e+00 : f32
      %18 = vector.broadcast %cst_8 : f32 to vector<32x128xf32>
      %c0_9 = arith.constant 0 : index
      %c0_10 = arith.constant 0 : index
      %19 = vector.load %arg4[%c0_9, %c0_10] : memref<32x128xf32, #tpu.memory_space<vmem>>, vector<32x128xf32>
      tpu.vector_store %arg4[%c0_9, %c0_10], %18 {strides = array<i32>} : memref<32x128xf32, #tpu.memory_space<vmem>>, vector<32x128xf32>,
    } else {
    }
    %c0 = arith.constant 0 : index
    %c0_1 = arith.constant 0 : index
    %3 = vector.load %arg2[%c0, %c0_1] : memref<32x128xf32, #tpu.memory_space<vmem>>, vector<32x128xf32>
    %c0_2 = arith.constant 0 : index
    %c0_3 = arith.constant 0 : index
    %4 = vector.load %arg3[%c0_2, %c0_3] : memref<32x128xf32, #tpu.memory_space<vmem>>, vector<32x128xf32>
    %5 = arith.subf %3, %4 : vector<32x128xf32>
    %6 = arith.mulf %5, %5 : vector<32x128xf32>
    %cst = arith.constant 9.99999997E-7 : f32
    %7 = vector.broadcast %cst : f32 to vector<32x128xf32>
    %8 = arith.addf %6, %7 : vector<32x128xf32>
    %9 = math.sqrt %8 : vector<32x128xf32>
    %c1_i32 = arith.constant 1 : i32
    %10 = arith.muli %arg0, %c1_i32 : i32
    %11 = arith.addi %10, %arg1 : i32
    %c0_i32_4 = arith.constant 0 : i32
    %12 = arith.cmpi slt, %11, %c0_i32_4 : i32
    %13 = arith.extui %12 : i1 to i32
    %c0_i32_5 = arith.constant 0 : i32
    %14 = arith.cmpi ne, %13, %c0_i32_5 : i32
    scf.if %14 {
      %c0_8 = arith.constant 0 : index
      %c0_9 = arith.constant 0 : index
      %18 = vector.load %arg4[%c0_8, %c0_9] : memref<32x128xf32, #tpu.memory_space<vmem>>, vector<32x128xf32>
      %19 = arith.addf %18, %9 : vector<32x128xf32>
      %c0_10 = arith.constant 0 : index
      %c0_11 = arith.constant 0 : index
      %20 = vector.load %arg4[%c0_10, %c0_11] : memref<32x128xf32, #tpu.memory_space<vmem>>, vector<32x128xf32>
      tpu.vector_store %arg4[%c0_10, %c0_11], %19 {strides = array<i32>} : memref<32x128xf32, #tpu.memory_space<vmem>>, vector<32x128xf32>,
    } else {
    }
    %c0_i32_6 = arith.constant 0 : i32
    %15 = arith.cmpi eq, %11, %c0_i32_6 : i32
    %16 = arith.extui %15 : i1 to i32
    %c0_i32_7 = arith.constant 0 : i32
    %17 = arith.cmpi ne, %16, %c0_i32_7 : i32
    scf.if %17 {
      %18 = tpu.iota {dimensions = array<i32: 0>} : vector<32x128xi32>
      %19 = tpu.iota {dimensions = array<i32: 1>} : vector<32x128xi32>
      %c128_i32 = arith.constant 128 : i32
      %20 = vector.broadcast %c128_i32 : i32 to vector<32x128xi32>
      %21 = arith.muli %18, %20 : vector<32x128xi32>
      %22 = arith.addi %21, %19 : vector<32x128xi32>
      %c0_8 = arith.constant 0 : index
      %c0_9 = arith.constant 0 : index
      %23 = vector.load %arg4[%c0_8, %c0_9] : memref<32x128xf32, #tpu.memory_space<vmem>>, vector<32x128xf32>
      %c2048_i32 = arith.constant 2048 : i32
      %24 = vector.broadcast %c2048_i32 : i32 to vector<32x128xi32>
      %25 = arith.cmpi slt, %22, %24 : vector<32x128xi32>
      %cst_10 = arith.constant 0.000000e+00 : f32
      %26 = vector.broadcast %cst_10 : f32 to vector<32x128xf32>
      %27 = arith.select %25, %9, %26 : vector<32x128xi1>, vector<32x128xf32>
      %28 = arith.addf %23, %27 : vector<32x128xf32>
      %c0_11 = arith.constant 0 : index
      %c0_12 = arith.constant 0 : index
      %29 = vector.load %arg4[%c0_11, %c0_12] : memref<32x128xf32, #tpu.memory_space<vmem>>, vector<32x128xf32>
      tpu.vector_store %arg4[%c0_11, %c0_12], %28 {strides = array<i32>} : memref<32x128xf32, #tpu.memory_space<vmem>>, vector<32x128xf32>,
    } else {
    }
    return
  }
  func.func @transform_0(%arg0: i32, %arg1: i32) -> (i32, i32) {
    %c1_i32 = arith.constant 1 : i32
    %0 = arith.muli %arg0, %c1_i32 : i32
    %1 = arith.addi %0, %arg1 : i32
    %c0_i32 = arith.constant 0 : i32
    %c0_i32_0 = arith.constant 0 : i32
    return %1, %c0_i32 : i32, i32
  }
  func.func @transform_1(%arg0: i32, %arg1: i32) -> (i32, i32) {
    %c1_i32 = arith.constant 1 : i32
    %0 = arith.muli %arg0, %c1_i32 : i32
    %1 = arith.addi %0, %arg1 : i32
    %c0_i32 = arith.constant 0 : i32
    %c0_i32_0 = arith.constant 0 : i32
    return %1, %c0_i32 : i32, i32
  }
  func.func @transform_2(%arg0: i32, %arg1: i32) -> (i32, i32) {
    %c0_i32 = arith.constant 0 : i32
    %c0_i32_0 = arith.constant 0 : i32
    return %arg0, %c0_i32 : i32, i32
  }
}

</mosaic_0001>

<llo_original>
// kernel: tpu_custom_call.1
$region0: #{tpu_custom_call.1}
  #allocation0 [shape = 'u32[]', space=smem, size = 0x4, offset = 0x4, fixed_abs, tag = 'smem constant byte address 0x4 - core index']
  #allocation1 [shape = 'u32[144,128]{1,0:T(1,128)}', space=vmem, size = 0x12000, scoped, tag = 'internal scratch']
  %s0 = inlined_call_operand.hbm [shape: f32[16,128], index: 0, kind: input, shape index: {}]
  %s1 = inlined_call_operand.hbm [shape: f32[16,128], index: 1, kind: input, shape index: {}]
  %s2 = inlined_call_operand.hbm [shape: f32[32,128], index: 2, kind: output, shape index: {}]
  %s3 = sld [smem:[#allocation0]]
  $region38: #{tpu_custom_call.1} parent=0
    _
  %s5 = ssub.s32 1, %s3
  %s6 = scalar_select 0, %s5, %s3
  $region1: #{tpu_custom_call.1} parent=0
    #allocation2 [shape = 'u8[16384]{0}', space=vmem, size = 0x4000, scoped, tag = 'input window, operand 0, single buffered']
    #allocation3 [shape = 's32[1]{0}', space=sflag, size = 0x4, scoped, tag = 'scoped memory for tpu_custom_call.1']
    #allocation4 [shape = 's32[1]{0}', space=sflag, size = 0x4, scoped, tag = 'scoped memory for tpu_custom_call.1']
    #allocation5 [shape = 'u8[16384]{0}', space=vmem, size = 0x4000, scoped, tag = 'input window, operand 1, single buffered']
    #allocation6 [shape = 's32[1]{0}', space=sflag, size = 0x4, scoped, tag = 'scoped memory for tpu_custom_call.1']
    #allocation7 [shape = 'u8[16384]{0}', space=vmem, size = 0x4000, scoped, tag = 'output window, operand 0, single buffered']
    %7 = vsyncpa [#allocation3], 0
    %8 = vsyncpa [#allocation6], 0
    %9 = vsyncpa [#allocation4], 0
    // Predicated region
    $region2: #{tpu_custom_call.1} parent=1 // pred_check
      _
    $region3: #{tpu_custom_call.1} parent=1 // pred_check_branch
      %11 = sbr.rel (0) target = $region5
    $region4: #{tpu_custom_call.1} parent=1 // pred_region
      %s12 = sadd.s32 0, 0
      %s13 = smul.u32 4, %s12
      %s14 = ssub.s32 2, %s13
      %s15 = smul.u32 128, %s14
      %s17 = ssub.s32 512, %s15
      %18 = vsyncadd [#allocation3], %s17
      %p19 = scmp.ne.s32.totalorder 0, %s15
      %s20 = smul.addr %s13, 128
      %s21 = scalar_lea.hbm %s0, %s20
      %s22 = smul.u32 8, %s14
      %s23 = sshll.u32 [#allocation2], 4
      %s24 = int_to_ptr.vmem [resolvable:$true] %s23
      %s25 = sshll.u32 %s22, 4
      %29 = dma.hbm_to_vmem [thread:$0]  (%p19), %s21, %s25, %s24, [#allocation3], 128, 128, 8
    $region5: #{tpu_custom_call.1} parent=1 // pred_fallthru
      _
    // Predicated region
    $region6: #{tpu_custom_call.1} parent=1 // pred_check
      _
    $region7: #{tpu_custom_call.1} parent=1 // pred_check_branch
      %31 = sbr.rel (0) target = $region9
    $region8: #{tpu_custom_call.1} parent=1 // pred_region
      %s32 = sadd.s32 0, 0
      %s33 = smul.u32 4, %s32
      %s34 = ssub.s32 2, %s33
      %s35 = smul.u32 128, %s34
      %s37 = ssub.s32 512, %s35
      %38 = vsyncadd [#allocation6], %s37
      %p39 = scmp.ne.s32.totalorder 0, %s35
      %s40 = smul.addr %s33, 128
      %s41 = scalar_lea.hbm %s1, %s40
      %s42 = smul.u32 8, %s34
      %s43 = sshll.u32 [#allocation5], 4
      %s44 = int_to_ptr.vmem [resolvable:$true] %s43
      %s45 = sshll.u32 %s42, 4
      %49 = dma.hbm_to_vmem [thread:$0]  (%p39), %s41, %s45, %s44, [#allocation6], 128, 128, 8
    $region9: #{tpu_custom_call.1} parent=1 // pred_fallthru
      _
    // Predicated region
    $region10: #{tpu_custom_call.1} parent=1 // pred_check
      _
    $region11: #{tpu_custom_call.1} parent=1 // pred_check_branch
      %51 = sbr.rel (0) target = $region13
    $region12: #{tpu_custom_call.1} parent=1 // pred_region
      %52 = dma.done [#allocation3], 512
    $region13: #{tpu_custom_call.1} parent=1 // pred_fallthru
      _
    // Predicated region
    $region14: #{tpu_custom_call.1} parent=1 // pred_check
      _
    $region15: #{tpu_custom_call.1} parent=1 // pred_check_branch
      %54 = sbr.rel (0) target = $region17
    $region16: #{tpu_custom_call.1} parent=1 // pred_region
      %55 = dma.done [#allocation6], 512
    $region17: #{tpu_custom_call.1} parent=1 // pred_fallthru
      _
    %s56 = sadd.s32 0, 0
    %s57 = smul.u32 4, %s56
    %s58 = ssub.s32 2, %s57
    %s59 = smul.u32 128, %s58
    %s60 = sadd.s32 0, 0
    %s61 = smul.u32 4, %s60
    %s62 = ssub.s32 2, %s61
    %s63 = smul.u32 128, %s62
    %p64 = scmp.eq.s32.totalorder 0, 0
    // Predicated region
    $region18: #{tpu_custom_call.1} parent=1 // pred_check
      %p65 = pneg %p64
    $region19: #{tpu_custom_call.1} parent=1 // pred_check_branch
      %67 = sbr.rel (%p65) target = $region21
    $region20: #{tpu_custom_call.1} parent=1 // pred_region
      %68 = vst [vmem:[#allocation7] sm:$0xff] 0.0
      %69 = vst [vmem:[#allocation7 + $0x8] sm:$0xff] 0.0
      %70 = vst [vmem:[#allocation7 + $0x10] sm:$0xff] 0.0
      %71 = vst [vmem:[#allocation7 + $0x18] sm:$0xff] 0.0
    $region21: #{tpu_custom_call.1} parent=1 // pred_fallthru
      _
    %v72 = vld [vmem:[#allocation2] sm:$0xff]
    %v73 = vld [vmem:[#allocation2 + $0x8] sm:$0xff]
    %v74 = vld [vmem:[#allocation2 + $0x10] sm:$0xff]
    %v75 = vld [vmem:[#allocation2 + $0x18] sm:$0xff]
    %v76 = vld [vmem:[#allocation5] sm:$0xff]
    %v77 = vld [vmem:[#allocation5 + $0x8] sm:$0xff]
    %v78 = vld [vmem:[#allocation5 + $0x10] sm:$0xff]
    %v79 = vld [vmem:[#allocation5 + $0x18] sm:$0xff]
    %v80 = vsub.f32 %v72, %v76
    %v81 = vsub.f32 %v73, %v77
    %v82 = vsub.f32 %v74, %v78
    %v83 = vsub.f32 %v75, %v79
    %v84 = vmul.f32 %v80, %v80
    %v85 = vmul.f32 %v81, %v81
    %v86 = vmul.f32 %v82, %v82
    %v87 = vmul.f32 %v83, %v83
    %v88 = vadd.f32 %v84, 1e-06
    %v89 = vadd.f32 %v85, 1e-06
    %v90 = vadd.f32 %v86, 1e-06
    %v91 = vadd.f32 %v87, 1e-06
    %v92 = vrsqrt.pop %v88
    %v93 = vmul.f32 %v88, %v92
    %vm94 = vcmp.eq.f32.partialorder %v88, inf
    %v95 = vsel %vm94, %v88, %v93
    %vm96 = vcmp.eq.f32.partialorder %v88, 0.0
    %v97 = vand.u32 %v88, 2147483648
    %v98 = vsel %vm96, %v97, %v95
    %v99 = vrsqrt.pop %v89
    %v100 = vmul.f32 %v89, %v99
    %vm101 = vcmp.eq.f32.partialorder %v89, inf
    %v102 = vsel %vm101, %v89, %v100
    %vm103 = vcmp.eq.f32.partialorder %v89, 0.0
    %v104 = vand.u32 %v89, 2147483648
    %v105 = vsel %vm103, %v104, %v102
    %v106 = vrsqrt.pop %v90
    %v107 = vmul.f32 %v90, %v106
    %vm108 = vcmp.eq.f32.partialorder %v90, inf
    %v109 = vsel %vm108, %v90, %v107
    %vm110 = vcmp.eq.f32.partialorder %v90, 0.0
    %v111 = vand.u32 %v90, 2147483648
    %v112 = vsel %vm110, %v111, %v109
    %v113 = vrsqrt.pop %v91
    %v114 = vmul.f32 %v91, %v113
    %vm115 = vcmp.eq.f32.partialorder %v91, inf
    %v116 = vsel %vm115, %v91, %v114
    %vm117 = vcmp.eq.f32.partialorder %v91, 0.0
    %v118 = vand.u32 %v91, 2147483648
    %v119 = vsel %vm117, %v118, %v116
    %s120 = sadd.s32 0, 0
    %p121 = scmp.lt.s32.totalorder %s120, 0
    // Predicated region
    $region22: #{tpu_custom_call.1} parent=1 // pred_check
      %p122 = pneg %p121
    $region23: #{tpu_custom_call.1} parent=1 // pred_check_branch
      %124 = sbr.rel (%p122) target = $region25
    $region24: #{tpu_custom_call.1} parent=1 // pred_region
      %v125 = vld [vmem:[#allocation7] sm:$0xff]
      %v126 = vld [vmem:[#allocation7 + $0x8] sm:$0xff]
      %v127 = vld [vmem:[#allocation7 + $0x10] sm:$0xff]
      %v128 = vld [vmem:[#allocation7 + $0x18] sm:$0xff]
      %v129 = vadd.f32 %v125, %v98
      %v130 = vadd.f32 %v126, %v105
      %v131 = vadd.f32 %v127, %v112
      %v132 = vadd.f32 %v128, %v119
      %133 = vst [vmem:[#allocation7] sm:$0xff] %v129
      %134 = vst [vmem:[#allocation7 + $0x8] sm:$0xff] %v130
      %135 = vst [vmem:[#allocation7 + $0x10] sm:$0xff] %v131
      %136 = vst [vmem:[#allocation7 + $0x18] sm:$0xff] %v132
    $region25: #{tpu_custom_call.1} parent=1 // pred_fallthru
      _
    %p137 = scmp.eq.s32.totalorder %s120, 0
    // Predicated region
    $region26: #{tpu_custom_call.1} parent=1 // pred_check
      %p138 = pneg %p137
    $region27: #{tpu_custom_call.1} parent=1 // pred_check_branch
      %140 = sbr.rel (%p138) target = $region29
    $region28: #{tpu_custom_call.1} parent=1 // pred_region
      %v141 = vlaneseq
      %v142 = vshrl.u32 %v141, 7
      %v143 = vadd.s32 %v142, 8
      %v144 = vadd.s32 %v142, 16
      %v145 = vadd.s32 %v142, 24
      %v146 = vlaneseq
      %v147 = vand.u32 %v146, 127
      %v148 = vmul.u32 %v142, 128
      %v149 = vmul.u32 %v143, 128
      %v150 = vmul.u32 %v144, 128
      %v151 = vmul.u32 %v145, 128
      %v152 = vadd.s32 %v148, %v147
      %v153 = vadd.s32 %v149, %v147
      %v154 = vadd.s32 %v150, %v147
      %v155 = vadd.s32 %v151, %v147
      %v156 = vld [vmem:[#allocation7] sm:$0xff]
      %v157 = vld [vmem:[#allocation7 + $0x8] sm:$0xff]
      %v158 = vld [vmem:[#allocation7 + $0x10] sm:$0xff]
      %v159 = vld [vmem:[#allocation7 + $0x18] sm:$0xff]
      %vm160 = vcmp.lt.s32.totalorder %v152, 2048
      %vm161 = vcmp.lt.s32.totalorder %v153, 2048
      %vm162 = vcmp.lt.s32.totalorder %v154, 2048
      %vm163 = vcmp.lt.s32.totalorder %v155, 2048
      %v164 = vsel %vm160, %v98, 0.0
      %v165 = vsel %vm161, %v105, 0.0
      %v166 = vsel %vm162, %v112, 0.0
      %v167 = vsel %vm163, %v119, 0.0
      %v168 = vadd.f32 %v156, %v164
      %v169 = vadd.f32 %v157, %v165
      %v170 = vadd.f32 %v158, %v166
      %v171 = vadd.f32 %v159, %v167
      %172 = vst [vmem:[#allocation7] sm:$0xff] %v168
      %173 = vst [vmem:[#allocation7 + $0x8] sm:$0xff] %v169
      %174 = vst [vmem:[#allocation7 + $0x10] sm:$0xff] %v170
      %175 = vst [vmem:[#allocation7 + $0x18] sm:$0xff] %v171
    $region29: #{tpu_custom_call.1} parent=1 // pred_fallthru
      _
    // Predicated region
    $region30: #{tpu_custom_call.1} parent=1 // pred_check
      _
    $region31: #{tpu_custom_call.1} parent=1 // pred_check_branch
      %177 = sbr.rel (0) target = $region33
    $region32: #{tpu_custom_call.1} parent=1 // pred_region
      %s179 = ssub.s32 512, 512
      %180 = vsyncadd [#allocation4], %s179
      %s181 = sshll.u32 [#allocation7], 4
      %s182 = int_to_ptr.vmem [resolvable:$true] %s181
      %187 = dma.vmem_to_hbm [thread:$0]  %s182, 512, %s2, [#allocation4], 128, 128, 8
    $region33: #{tpu_custom_call.1} parent=1 // pred_fallthru
      _
    // Predicated region
    $region34: #{tpu_custom_call.1} parent=1 // pred_check
      _
    $region35: #{tpu_custom_call.1} parent=1 // pred_check_branch
      %189 = sbr.rel (0) target = $region37
    $region36: #{tpu_custom_call.1} parent=1 // pred_region
      %190 = dma.done [#allocation4], 512
    $region37: #{tpu_custom_call.1} parent=1 // pred_fallthru
      _
    %191 = vsyncpa [#allocation3], 1
    %192 = vsyncpa [#allocation6], 1
    %193 = vsyncpa [#allocation4], 1

</llo_original>
